<compile_context>
chip_gen: v5e
topology: v5e:2x2
jax: 0.10.0
libtpu: 0.0.40
codegen_flags: <defaults>
</compile_context>

<pallas_src>
import functools
import math

import jax
import jax.numpy as jnp
from jax.experimental import pallas as pl
from jax.experimental.pallas import tpu as pltpu


def _vmem_capacity_bytes():
    """Per-core VMEM capacity; conservative 64 MiB (v7x) fallback."""
    try:
        cap = int(pltpu.get_tpu_info().vmem_capacity_bytes)
        if cap > 0:
            return cap
    except Exception:
        pass
    return 64 << 20


def _concat_mid_kernel(*refs, offsets, sizes):
    """Copy (rblk, C_i, tb) input tiles into channel slices of the
    (rblk, C_total, tb) output tile.  Offsets are static sublane offsets;
    the lane axis (tb) is always dense."""
    *in_refs, o_ref = refs
    for ref, off, c in zip(in_refs, offsets, sizes):
        o_ref[:, off:off + c, :] = ref[...]


def _concat_last_kernel(*refs, offsets, sizes):
    """Copy (rblk, w_i) input tiles into lane slices of the (rblk, W) output
    tile (concat along the last axis)."""
    # TODO(synk): lane offsets here can be 128-misaligned (masked vst); could
    # regroup/pad widths if this path ever becomes hot.
    *in_refs, o_ref = refs
    for ref, off, w in zip(in_refs, offsets, sizes):
        o_ref[:, off:off + w] = ref[...]


def concat(xs, dimension=1):
    """Pallas TPU equivalent of `torch.cat(xs, dim=dimension)`."""
    xs = list(xs)
    assert len(xs) >= 1
    ndim = xs[0].ndim
    d = dimension % ndim
    base = xs[0].shape
    dtype = xs[0].dtype
    for x in xs:
        assert x.dtype == dtype, "all inputs must share a dtype"
        assert x.ndim == ndim
        assert x.shape[:d] == base[:d] and x.shape[d + 1:] == base[d + 1:], \
            "non-concat dims must match"

    out_c = sum(int(x.shape[d]) for x in xs)
    out_shape = base[:d] + (out_c,) + base[d + 1:]

    # Degenerate / empty outputs: nothing to copy.
    if any(int(s) == 0 for s in out_shape):
        return jnp.zeros(out_shape, dtype)

    # Drop zero-width inputs (a (rb, 0) BlockSpec would not lower).
    xs = [x for x in xs if int(x.shape[d]) > 0]
    if len(xs) == 1:
        return xs[0]

    R = int(math.prod(base[:d]))          # prod(()) == 1 for d == 0
    T = int(math.prod(base[d + 1:]))
    Cs = tuple(int(x.shape[d]) for x in xs)
    C_total = sum(Cs)
    offsets, acc = [], 0
    for c in Cs:
        offsets.append(acc)
        acc += c
    offsets = tuple(offsets)

    itemsize = jnp.dtype(dtype).itemsize
    vmem_cap = _vmem_capacity_bytes()
    # ~4 MiB output block on 64 MiB VMEM (v7x), ~8 MiB on 128 MiB (v5e/v6e).
    target = int(min(8 << 20, max(2 << 20, vmem_cap // 16)))

    if T == 1:
        # Concat along the last axis: 2-D lane-concat layout.
        xs_flat = [x.reshape(R, c) for x, c in zip(xs, Cs)]
        k = max(1, 32 // itemsize)                    # packed-sublane multiple
        rows_fit = max(1, target // max(1, C_total * itemsize))
        rblk = R if rows_fit >= R else min(R, max(k, (rows_fit // k) * k))
        grid = (pl.cdiv(R, rblk),)
        in_specs = [pl.BlockSpec((rblk, c), lambda r: (r, 0)) for c in Cs]
        out_specs = pl.BlockSpec((rblk, C_total), lambda r: (r, 0))
        kernel = functools.partial(_concat_last_kernel,
                                   offsets=offsets, sizes=Cs)
        out_block_bytes = rblk * C_total * itemsize
        flat_out_shape = (R, C_total)
        semantics = ("parallel",)
    else:
        # General case (channel concat): 3-D layout, tile rows and trailing.
        xs_flat = [x.reshape(R, c, T) for x, c in zip(xs, Cs)]
        row_bytes = C_total * T * itemsize
        if row_bytes <= target:
            tb = T
            rblk = min(R, max(1, target // row_bytes))
        else:
            rblk = 1
            lanes_fit = max(1, target // (C_total * itemsize))
            if lanes_fit >= T:
                tb = T
            else:
                tb = min(T, max(128, (lanes_fit // 128) * 128))
        grid = (pl.cdiv(R, rblk), pl.cdiv(T, tb))
        in_specs = [pl.BlockSpec((rblk, c, tb), lambda r, t: (r, 0, t))
                    for c in Cs]
        out_specs = pl.BlockSpec((rblk, C_total, tb), lambda r, t: (r, 0, t))
        kernel = functools.partial(_concat_mid_kernel,
                                   offsets=offsets, sizes=Cs)
        out_block_bytes = rblk * C_total * tb * itemsize
        flat_out_shape = (R, C_total, T)
        semantics = ("parallel", "parallel")

    # Double-buffered footprint ~= 4x output-block bytes; leave headroom but
    # never ask for more than the chip physically has.
    vmem_limit = int(min(vmem_cap, max(32 << 20, 6 * out_block_bytes)))
    total_bytes = 2 * R * C_total * T * itemsize      # read + write

    out_flat = pl.pallas_call(
        kernel,
        out_shape=jax.ShapeDtypeStruct(flat_out_shape, dtype),
        grid=grid,
        in_specs=in_specs,
        out_specs=out_specs,
        compiler_params=pltpu.CompilerParams(
            dimension_semantics=semantics,
            vmem_limit_bytes=vmem_limit),
        cost_estimate=pl.CostEstimate(
            flops=0, transcendentals=0, bytes_accessed=int(total_bytes)),
    )(*xs_flat)

    return out_flat.reshape(out_shape)


if __name__ == "__main__":
    key = jax.random.PRNGKey(0)
    k1, k2, k3, k4, k5 = jax.random.split(key, 5)

    # 1) Typical YOLO usage: channel concat on NCHW.
    x1 = jax.random.normal(k1, (2, 4, 16, 16), dtype=jnp.float32)
    x2 = jax.random.normal(k2, (2, 6, 16, 16), dtype=jnp.float32)
    out = jax.block_until_ready(concat([x1, x2], dimension=1))
    ref = jnp.concatenate([x1, x2], axis=1)
    assert out.shape == ref.shape and out.dtype == ref.dtype
    assert jnp.array_equal(out, ref), "mismatch vs jnp.concatenate (case 1)"

    # 2) bf16, three inputs, batch 1 (the small-R regime the review flagged).
    y1 = jax.random.normal(k3, (1, 8, 8, 32), dtype=jnp.bfloat16)
    y2 = jax.random.normal(k4, (1, 16, 8, 32), dtype=jnp.bfloat16)
    y3 = jax.random.normal(k5, (1, 8, 8, 32), dtype=jnp.bfloat16)
    out_b = jax.block_until_ready(concat([y1, y2, y3], dimension=1))
    ref_b = jnp.concatenate([y1, y2, y3], axis=1)
    assert out_b.shape == ref_b.shape and out_b.dtype == ref_b.dtype
    assert jnp.array_equal(out_b, ref_b), "mismatch (case 2)"

    # 3) Concat along the last axis (exercises the 2-D lane-concat path).
    z1 = jax.random.normal(k1, (4, 8, 24), dtype=jnp.float32)
    z2 = jax.random.normal(k2, (4, 8, 40), dtype=jnp.float32)
    out_c = jax.block_until_ready(concat([z1, z2], dimension=-1))
    ref_c = jnp.concatenate([z1, z2], axis=-1)
    assert out_c.shape == ref_c.shape and out_c.dtype == ref_c.dtype
    assert jnp.array_equal(out_c, ref_c), "mismatch (case 3)"

    print("KERNEL_OK")
</pallas_src>

<mosaic_0001>
module attributes {stable_mosaic.version = 11 : i64} {
  func.func @_concat_mid_kernel(%arg0: i32, %arg1: i32, %arg2: memref<2x4x256xf32, #tpu.memory_space<vmem>>, %arg3: memref<2x6x256xf32, #tpu.memory_space<vmem>>, %arg4: memref<2x10x256xf32, #tpu.memory_space<vmem>>) attributes {dimension_semantics = [#tpu.dimension_semantics<parallel>, #tpu.dimension_semantics<parallel>], iteration_bounds = array<i64: 1, 1>, scalar_prefetch = 0 : i64, scratch_operands = 0 : i64, tpu.core_type = #tpu.core_type<tc>, window_params = [{transform_indices = @transform_0, window_bounds = array<i64: 2, 4, 256>}, {transform_indices = @transform_1, window_bounds = array<i64: 2, 6, 256>}, {transform_indices = @transform_2, window_bounds = array<i64: 2, 10, 256>}]} {
    %c0 = arith.constant 0 : index
    %c0_0 = arith.constant 0 : index
    %c0_1 = arith.constant 0 : index
    %0 = vector.load %arg2[%c0, %c0_0, %c0_1] : memref<2x4x256xf32, #tpu.memory_space<vmem>>, vector<2x4x256xf32>
    %c0_2 = arith.constant 0 : index
    %c0_3 = arith.constant 0 : index
    %c0_4 = arith.constant 0 : index
    %1 = vector.load %arg4[%c0_2, %c0_3, %c0_4] : memref<2x10x256xf32, #tpu.memory_space<vmem>>, vector<2x4x256xf32>
    tpu.vector_store %arg4[%c0_2, %c0_3, %c0_4], %0 {strides = array<i32>} : memref<2x10x256xf32, #tpu.memory_space<vmem>>, vector<2x4x256xf32>,
    %c0_5 = arith.constant 0 : index
    %c0_6 = arith.constant 0 : index
    %c0_7 = arith.constant 0 : index
    %2 = vector.load %arg3[%c0_5, %c0_6, %c0_7] : memref<2x6x256xf32, #tpu.memory_space<vmem>>, vector<2x6x256xf32>
    %c0_8 = arith.constant 0 : index
    %c4 = arith.constant 4 : index
    %c0_9 = arith.constant 0 : index
    %3 = vector.load %arg4[%c0_8, %c4, %c0_9] : memref<2x10x256xf32, #tpu.memory_space<vmem>>, vector<2x6x256xf32>
    tpu.vector_store %arg4[%c0_8, %c4, %c0_9], %2 {strides = array<i32>} : memref<2x10x256xf32, #tpu.memory_space<vmem>>, vector<2x6x256xf32>,
    return
  }
  func.func @transform_0(%arg0: i32, %arg1: i32) -> (i32, i32, i32) {
    %c0_i32 = arith.constant 0 : i32
    %c0_i32_0 = arith.constant 0 : i32
    return %arg0, %c0_i32, %arg1 : i32, i32, i32
  }
  func.func @transform_1(%arg0: i32, %arg1: i32) -> (i32, i32, i32) {
    %c0_i32 = arith.constant 0 : i32
    %c0_i32_0 = arith.constant 0 : i32
    return %arg0, %c0_i32, %arg1 : i32, i32, i32
  }
  func.func @transform_2(%arg0: i32, %arg1: i32) -> (i32, i32, i32) {
    %c0_i32 = arith.constant 0 : i32
    %c0_i32_0 = arith.constant 0 : i32
    return %arg0, %c0_i32, %arg1 : i32, i32, i32
  }
}

</mosaic_0001>

<llo_original>
// kernel: tpu_custom_call.1
$region0: #{tpu_custom_call.1}
  #allocation0 [shape = 'u32[]', space=smem, size = 0x4, offset = 0x4, fixed_abs, tag = 'smem constant byte address 0x4 - core index']
  #allocation1 [shape = 'u32[72,128]{1,0:T(1,128)}', space=vmem, size = 0x9000, scoped, tag = 'internal scratch']
  %s0 = inlined_call_operand.vmem [shape: f32[2,4,256], index: 0, kind: input, shape index: {}]
  %s1 = inlined_call_operand.vmem [shape: f32[2,6,256], index: 1, kind: input, shape index: {}]
  %s2 = inlined_call_operand.vmem [shape: f32[2,10,256], index: 2, kind: output, shape index: {}]
  %s3 = sld [smem:[#allocation0]]
  $region18: #{tpu_custom_call.1} parent=0
    _
  %s5 = ssub.s32 1, %s3
  %s6 = scalar_select 0, %s5, %s3
  // Predicated region
  $region2: #{tpu_custom_call.1} parent=0 // pred_check
    _
  $region3: #{tpu_custom_call.1} parent=0 // pred_check_branch
    %8 = sbr.rel (0) target = $region5
  $region4: #{tpu_custom_call.1} parent=0 // pred_region
    _
  $region5: #{tpu_custom_call.1} parent=0 // pred_fallthru
    _
  // Predicated region
  $region6: #{tpu_custom_call.1} parent=0 // pred_check
    _
  $region7: #{tpu_custom_call.1} parent=0 // pred_check_branch
    %10 = sbr.rel (0) target = $region9
  $region8: #{tpu_custom_call.1} parent=0 // pred_region
    _
  $region9: #{tpu_custom_call.1} parent=0 // pred_fallthru
    _
  %v11 = vld [vmem:[%s0] sm:$0xff]
  %v12 = vld [vmem:[%s0 + $0x8] sm:$0xff]
  %15 = vst [vmem:[#allocation1] ss:$2 sm:$0xff] %v11
  %v16 = vld.sshfl [vmem:[#allocation1] sm:$0xff pattern:$0x75316420]
  %v17 = vld.sshfl [vmem:[#allocation1 + $0x8] sm:$0xff pattern:$0x75316420]
  %s18 = scalar_lea.vmem [#allocation1], 16
  %19 = vst [vmem:[%s18] ss:$2 sm:$0xff] %v12
  %v20 = vld.sshfl [vmem:[#allocation1 + $0x10] sm:$0xff pattern:$0x75316420]
  %v21 = vld.sshfl [vmem:[#allocation1 + $0x18] sm:$0xff pattern:$0x75316420]
  %26 = vst [vmem:[%s2] sm:$0xf] %v16
  %27 = vst [vmem:[%s2 + $0x8] sm:$0xf] %v17
  %28 = vst [vmem:[%s2 + $0x20] sm:$0xf] %v20
  %29 = vst [vmem:[%s2 + $0x28] sm:$0xf] %v21
  %v30 = vld [vmem:[%s1] sm:$0x3f]
  %v31 = vld [vmem:[%s1 + $0x8] sm:$0x3f]
  %v32 = vld [vmem:[%s1 + $0x10] sm:$0x3f]
  %v33 = vld [vmem:[%s1 + $0x18] sm:$0x3f]
  %v38 = vrot.slane %v30, 4
  %v39 = vrot.slane %v31, 4
  %v40 = vrot.slane %v32, 4
  %v41 = vrot.slane %v33, 4
  %46 = vst [vmem:[%s2] sm:$0xf0] %v38
  %47 = vst [vmem:[%s2 + $0x8] sm:$0xf0] %v39
  %48 = vst [vmem:[%s2 + $0x10] sm:$0x3] %v38
  %49 = vst [vmem:[%s2 + $0x18] sm:$0x3] %v39
  %50 = vst [vmem:[%s2 + $0x20] sm:$0xf0] %v40
  %51 = vst [vmem:[%s2 + $0x28] sm:$0xf0] %v41
  %52 = vst [vmem:[%s2 + $0x30] sm:$0x3] %v40
  %53 = vst [vmem:[%s2 + $0x38] sm:$0x3] %v41
  // Predicated region
  $region10: #{tpu_custom_call.1} parent=0 // pred_check
    _
  $region11: #{tpu_custom_call.1} parent=0 // pred_check_branch
    %55 = sbr.rel (0) target = $region13
  $region12: #{tpu_custom_call.1} parent=0 // pred_region
    _
  $region13: #{tpu_custom_call.1} parent=0 // pred_fallthru
    _
  // Predicated region
  $region14: #{tpu_custom_call.1} parent=0 // pred_check
    _
  $region15: #{tpu_custom_call.1} parent=0 // pred_check_branch
    %57 = sbr.rel (0) target = $region17
  $region16: #{tpu_custom_call.1} parent=0 // pred_region
    _
  $region17: #{tpu_custom_call.1} parent=0 // pred_fallthru
    _

</llo_original>
